<compile_context>
chip_gen: v7x
topology: tpu7x:2x2x1
jax: 0.10.0
libtpu: 0.0.40
codegen_flags: <defaults>
</compile_context>

<pallas_src>
import jax
import jax.numpy as jnp
from jax.experimental import pallas as pl
from jax.experimental.pallas import tpu as pltpu

_MIB = 1024 * 1024
_SUBLANE_MULT = 32      # dtype-agnostic sublane packing multiple (f32:8, bf16:16, int8/fp8:32)
_LANE_MULT = 128


def _tcl_kernel(up_ref, x_ref, o_ref):
    # up_ref: SMEM scalar-prefetch ref, shape (1,), f32. x_ref/o_ref: VMEM tiles.
    x = x_ref[...]
    up = up_ref[0].astype(x.dtype)
    # clamp(x / up, 0, 1) * up  ==  clip(x, 0, up)   (exact for up > 0).
    # NOTE: diverges from the reference if up <= 0 (learnable param; documented
    # assumption). For sub-f32 dtypes `up` is rounded to x.dtype (ulp-level diff).
    o_ref[...] = jnp.clip(x, 0.0, up)


def _target_block_bytes() -> int:
    """Generation-aware streamed-block size (per-step overhead vs HBM BW)."""
    try:
        kind = jax.devices()[0].device_kind.lower()
    except Exception:
        kind = ""
    if "v7" in kind:
        return 6 * _MIB   # ~3.2 TB/s HBM: keep the ~0.35 us/step overhead < ~10%
    if "v5" in kind:
        return 2 * _MIB   # ~0.82 TB/s HBM: 2 MiB blocks are already ~95% overhead-free
    return 4 * _MIB       # v6e and default


def tcl_forward(x: jax.Array, up: jax.Array, *,
                min_kernel_bytes: int = 1 << 20,
                donate_input: bool = False) -> jax.Array:
    """Threshold/Clipped ReLU: clamp(x / up, 0, 1) * up.

    Assumes up > 0 (true for the module's init up=4.0). x: any shape / float
    dtype; up: shape (1,) learnable threshold. `jnp.ravel` is free only for
    contiguous layouts (perf, not numerics).
    """
    orig_shape = x.shape
    n = x.size
    itemsize = jnp.dtype(x.dtype).itemsize

    # Tiny tensors: kernel launch + pipeline prologue dwarfs the work; a fused
    # XLA elementwise op is strictly faster.
    if n * itemsize < min_kernel_bytes:
        return jnp.clip(x, jnp.asarray(0.0, x.dtype), up.astype(x.dtype)[0])

    up_f32 = up.astype(jnp.float32)
    target_bytes = _target_block_bytes()
    io_aliases = {1: 0} if donate_input else {}

    x_flat = jnp.ravel(x)

    if n % _LANE_MULT == 0:
        # ---- aligned path: lane-dense 2-D slab streamed over rows -----------
        lane = next(c for c in (1024, 512, 256, 128) if n % c == 0)
        rows = n // lane
        x2d = x_flat.reshape(rows, lane)

        bytes_per_row = lane * itemsize
        max_tile_r = max(_SUBLANE_MULT,
                         (target_bytes // bytes_per_row) // _SUBLANE_MULT * _SUBLANE_MULT)
        # Keep at least 2 blocks when splittable so v7x's 2nd TC gets work.
        if rows > 2 * _SUBLANE_MULT:
            half = pl.cdiv(pl.cdiv(rows, 2), _SUBLANE_MULT) * _SUBLANE_MULT
            max_tile_r = min(max_tile_r, half)
        tile_r = rows if rows <= max_tile_r else max_tile_r   # full extent is always legal
        num_blocks = pl.cdiv(rows, tile_r)
        block_bytes = tile_r * lane * itemsize

        grid_spec = pltpu.PrefetchScalarGridSpec(
            num_scalar_prefetch=1,                      # `up` lands in SMEM before the grid
            grid=(num_blocks,),
            in_specs=[pl.BlockSpec((tile_r, lane), lambda i, up_ref: (i, 0))],
            out_specs=pl.BlockSpec((tile_r, lane), lambda i, up_ref: (i, 0)),
        )
        out_shape = jax.ShapeDtypeStruct((rows, lane), x.dtype)
        operand = x2d
    else:
        # ---- unaligned path: 1-D stream, partial trailing block, no pad copy -
        elems_mult = _SUBLANE_MULT * _LANE_MULT         # 4096: packing-safe for all dtypes
        block_n = max(elems_mult,
                      (target_bytes // itemsize) // elems_mult * elems_mult)
        if n <= block_n:
            block_n = n                                 # single full-extent block
        num_blocks = pl.cdiv(n, block_n)
        block_bytes = block_n * itemsize

        grid_spec = pltpu.PrefetchScalarGridSpec(
            num_scalar_prefetch=1,
            grid=(num_blocks,),
            in_specs=[pl.BlockSpec((block_n,), lambda i, up_ref: (i,))],
            out_specs=pl.BlockSpec((block_n,), lambda i, up_ref: (i,)),
        )
        out_shape = jax.ShapeDtypeStruct((n,), x.dtype)
        operand = x_flat

    # VMEM: in + out, double-buffered = 4x block; leave headroom, stay well
    # under v7x's 64 MiB physical VMEM (and above v5e's 16 MiB default scope).
    vmem_limit = int(min(max(32 * _MIB, 6 * block_bytes), 48 * _MIB))

    out = pl.pallas_call(
        _tcl_kernel,
        out_shape=out_shape,
        grid_spec=grid_spec,
        compiler_params=pltpu.CompilerParams(
            dimension_semantics=("parallel",),
            vmem_limit_bytes=vmem_limit),
        input_output_aliases=io_aliases,
    )(up_f32, operand)

    return out.reshape(orig_shape)


if __name__ == "__main__":
    key = jax.random.PRNGKey(0)
    k1, k2 = jax.random.split(key)

    up = jnp.array([4.0], dtype=jnp.float32)   # matches TCL.__init__ (up = 4.0)

    def ref(x):
        return jnp.clip(x / up[0], 0.0, 1.0) * up[0]

    # (1) small NCHW activation, lane-aligned numel -> 2-D slab kernel path
    x1 = jax.random.normal(k1, (2, 4, 16, 16), dtype=jnp.float32) * 3.0
    y1 = tcl_forward(x1, up, min_kernel_bytes=0)       # force the Pallas kernel
    jax.block_until_ready(y1)
    assert y1.shape == x1.shape and y1.dtype == x1.dtype
    assert jnp.allclose(y1, ref(x1), atol=1e-6), "aligned path mismatch"

    # (2) unaligned numel (105 elements) -> 1-D kernel path, no pad/slice copy
    x2 = jax.random.normal(k2, (3, 5, 7), dtype=jnp.float32) * 3.0
    y2 = tcl_forward(x2, up, min_kernel_bytes=0)
    jax.block_until_ready(y2)
    assert y2.shape == x2.shape and y2.dtype == x2.dtype
    assert jnp.allclose(y2, ref(x2), atol=1e-6), "unaligned path mismatch"

    # (3) default tiny-input bypass (fused XLA clip)
    y3 = tcl_forward(x1, up)
    jax.block_until_ready(y3)
    assert jnp.allclose(y3, ref(x1), atol=1e-6), "bypass path mismatch"

    print("KERNEL_OK")
</pallas_src>

<mosaic_0001>
module attributes {stable_mosaic.version = 11 : i64} {
  func.func @_tcl_kernel(%arg0: i32, %arg1: memref<1xf32, #tpu.memory_space<smem>>, %arg2: memref<2x1024xf32, #tpu.memory_space<vmem>>, %arg3: memref<2x1024xf32, #tpu.memory_space<vmem>>) attributes {dimension_semantics = [#tpu.dimension_semantics<parallel>], iteration_bounds = array<i64: 1>, scalar_prefetch = 1 : i64, scratch_operands = 0 : i64, tpu.core_type = #tpu.core_type<tc>, window_params = [{transform_indices = @transform_0, window_bounds = array<i64: 2, 1024>}, {transform_indices = @transform_1, window_bounds = array<i64: 2, 1024>}]} {
    %c0 = arith.constant 0 : index
    %c0_0 = arith.constant 0 : index
    %0 = vector.load %arg2[%c0, %c0_0] : memref<2x1024xf32, #tpu.memory_space<vmem>>, vector<2x1024xf32>
    %c0_1 = arith.constant 0 : index
    %1 = memref.load %arg1[%c0_1] : memref<1xf32, #tpu.memory_space<smem>>
    %cst = arith.constant 0.000000e+00 : f32
    %2 = vector.broadcast %cst : f32 to vector<2x1024xf32>
    %3 = arith.maximumf %2, %0 : vector<2x1024xf32>
    %4 = vector.broadcast %1 : f32 to vector<2x1024xf32>
    %5 = arith.minimumf %4, %3 : vector<2x1024xf32>
    %c0_2 = arith.constant 0 : index
    %c0_3 = arith.constant 0 : index
    %6 = vector.load %arg3[%c0_2, %c0_3] : memref<2x1024xf32, #tpu.memory_space<vmem>>, vector<2x1024xf32>
    tpu.vector_store %arg3[%c0_2, %c0_3], %5 {strides = array<i32>} : memref<2x1024xf32, #tpu.memory_space<vmem>>, vector<2x1024xf32>,
    return
  }
  func.func @transform_0(%arg0: i32, %arg1: memref<1xf32, #tpu.memory_space<smem>>) -> (i32, i32) {
    %c0_i32 = arith.constant 0 : i32
    %c0_i32_0 = arith.constant 0 : i32
    return %arg0, %c0_i32 : i32, i32
  }
  func.func @transform_1(%arg0: i32, %arg1: memref<1xf32, #tpu.memory_space<smem>>) -> (i32, i32) {
    %c0_i32 = arith.constant 0 : i32
    %c0_i32_0 = arith.constant 0 : i32
    return %arg0, %c0_i32 : i32, i32
  }
}

</mosaic_0001>

<llo_original>
// kernel: tpu_custom_call.1
$region0: #{tpu_custom_call.1}
  #allocation0 [shape = 'u32[]', space=smem, size = 0x4, offset = 0x4, fixed_abs, tag = 'smem constant byte address 0x4 - core index']
  #allocation1 [shape = 'u32[144,128]{1,0:T(1,128)}', space=vmem, size = 0x12000, scoped, tag = 'internal scratch']
  #allocation2 [shape = 's32[1]{0}', space=sflag, size = 0x4, scoped, tag = 'scoped memory for tpu_custom_call.1']
  #allocation3 [shape = 'f32[1]{0:T(128)S(6)}', space=smem, size = 0x200, scoped, tag = 'prefetched SMEM operand 0']
  %s0 = inlined_call_operand.<no memory space> [shape: f32[1], index: 0, kind: input, shape index: {}]
  %s1 = inlined_call_operand.hbm [shape: f32[2,1024], index: 1, kind: input, shape index: {}]
  %s2 = inlined_call_operand.hbm [shape: f32[2,1024], index: 2, kind: output, shape index: {}]
  %s3 = sld [smem:[#allocation0]]
  $region18: #{tpu_custom_call.1} parent=0
    _
  %s5 = ssub.s32 1, %s3
  %s6 = scalar_select 0, %s5, %s3
  %7 = sst [smem:[#allocation3]] %s0
  $region1: #{tpu_custom_call.1} parent=0
    #allocation4 [shape = 'u8[8192]{0}', space=vmem, size = 0x2000, scoped, tag = 'input window, operand 1, single buffered']
    #allocation5 [shape = 's32[1]{0}', space=sflag, size = 0x4, scoped, tag = 'scoped memory for tpu_custom_call.1']
    #allocation6 [shape = 's32[1]{0}', space=sflag, size = 0x4, scoped, tag = 'scoped memory for tpu_custom_call.1']
    #allocation7 [shape = 'u8[8192]{0}', space=vmem, size = 0x2000, scoped, tag = 'output window, operand 0, single buffered']
    %8 = vsyncpa [#allocation5], 0
    %9 = vsyncpa [#allocation6], 0
    // Predicated region
    $region2: #{tpu_custom_call.1} parent=1 // pred_check
      _
    $region3: #{tpu_custom_call.1} parent=1 // pred_check_branch
      %11 = sbr.rel (0) target = $region5
    $region4: #{tpu_custom_call.1} parent=1 // pred_region
      %s13 = ssub.s32 256, 256
      %14 = vsyncadd [#allocation5], %s13
      %s16 = sshll.u32 [#allocation4], 4
      %s17 = int_to_ptr.vmem [resolvable:$true] %s16
      %19 = dma.hbm_to_vmem [thread:$0]  %s1, 256, %s17, [#allocation5]
    $region5: #{tpu_custom_call.1} parent=1 // pred_fallthru
      _
    // Predicated region
    $region6: #{tpu_custom_call.1} parent=1 // pred_check
      _
    $region7: #{tpu_custom_call.1} parent=1 // pred_check_branch
      %21 = sbr.rel (0) target = $region9
    $region8: #{tpu_custom_call.1} parent=1 // pred_region
      %22 = dma.done [#allocation5], 256
    $region9: #{tpu_custom_call.1} parent=1 // pred_fallthru
      _
    %v23 = vld [vmem:[#allocation4] sm:$0xff]
    %v24 = vld [vmem:[#allocation4 + $0x8] sm:$0xff]
    %s25 = sld [smem:[#allocation3]]
    %v26 = vmax.f32 %v23, 0.0
    %v27 = vmax.f32 %v24, 0.0
    %v28 = vstv %s25
    %v29 = vmin.f32 %v28, %v26
    %v30 = vmin.f32 %v28, %v27
    %31 = vst [vmem:[#allocation7] sm:$0xff] %v29
    %32 = vst [vmem:[#allocation7 + $0x8] sm:$0xff] %v30
    // Predicated region
    $region10: #{tpu_custom_call.1} parent=1 // pred_check
      _
    $region11: #{tpu_custom_call.1} parent=1 // pred_check_branch
      %34 = sbr.rel (0) target = $region13
    $region12: #{tpu_custom_call.1} parent=1 // pred_region
      %s36 = ssub.s32 256, 256
      %37 = vsyncadd [#allocation6], %s36
      %s39 = sshll.u32 [#allocation7], 4
      %s40 = int_to_ptr.vmem [resolvable:$true] %s39
      %42 = dma.vmem_to_hbm [thread:$0]  %s40, 256, %s2, [#allocation6]
    $region13: #{tpu_custom_call.1} parent=1 // pred_fallthru
      _
    // Predicated region
    $region14: #{tpu_custom_call.1} parent=1 // pred_check
      _
    $region15: #{tpu_custom_call.1} parent=1 // pred_check_branch
      %44 = sbr.rel (0) target = $region17
    $region16: #{tpu_custom_call.1} parent=1 // pred_region
      %45 = dma.done [#allocation6], 256
    $region17: #{tpu_custom_call.1} parent=1 // pred_fallthru
      _
    %46 = vsyncpa [#allocation5], 1
    %47 = vsyncpa [#allocation6], 1

</llo_original>
